<compile_context>
chip_gen: v7x
topology: tpu7x:2x2x1
jax: 0.10.0
libtpu: 0.0.40
codegen_flags: <defaults>
</compile_context>

<pallas_src>
import functools

import jax
import jax.numpy as jnp
from jax import lax
from jax.experimental import pallas as pl
from jax.experimental.pallas import tpu as pltpu


# --------------------------------------------------------------------------
# Excitation MLP (runs on the MXU; inputs/outputs are f32)
# --------------------------------------------------------------------------
def _excite(y_f32, w1_ref, w2_ref):
    """y (Bt, C) f32 -> sigmoid gate (Bt, C) f32.

    w1_ref: fc1.weight laid out (Cr, C); w2_ref: fc2.weight.T laid out (Cr, C).
    """
    w1 = w1_ref[...].astype(jnp.float32)                          # (Cr, C)
    w2 = w2_ref[...].astype(jnp.float32)                          # (Cr, C)
    # h[b, r] = sum_c y[b, c] * w1[r, c]
    h = lax.dot_general(y_f32, w1,
                        dimension_numbers=(((1,), (1,)), ((), ())),
                        preferred_element_type=jnp.float32,
                        precision=lax.Precision.HIGHEST)          # (Bt, Cr)
    h = jnp.maximum(h, 0.0)
    s = jnp.dot(h, w2, preferred_element_type=jnp.float32,
                precision=lax.Precision.HIGHEST)                  # (Bt, C)
    return jax.nn.sigmoid(s)


# --------------------------------------------------------------------------
# Fused single-pass kernel: whole (Bt, C, HW) slab resident in VMEM
# --------------------------------------------------------------------------
def _se_kernel_fused(x_ref, w1_ref, w2_ref, o_ref):
    inv_hw = 1.0 / x_ref.shape[-1]
    # Squeeze: f32-accumulated mean over the spatial axis.
    y = jnp.sum(x_ref[...], axis=-1, dtype=jnp.float32) * inv_hw  # (Bt, C)
    gate = _excite(y, w1_ref, w2_ref)                             # (Bt, C) f32
    g = gate[:, :, None].astype(o_ref.dtype)
    o_ref[...] = (x_ref[...] * g).astype(o_ref.dtype)


# --------------------------------------------------------------------------
# C-chunked two-phase fallback kernel (slab does not fit at Bt=1)
#   grid = (B, 2, nk); x/out block (1, Cc, HW); weights blocked (1, Cr, Cc);
#   acc scratch (1, Cr) f32 holds the FC1 pre-activation.
# --------------------------------------------------------------------------
def _se_kernel_split(hw_total, x_ref, w1_ref, w2_ref, o_ref, acc_ref):
    p = pl.program_id(1)   # 0 = reduce phase, 1 = scale phase
    k = pl.program_id(2)   # channel-chunk index

    @pl.when(jnp.logical_and(p == 0, k == 0))
    def _():
        acc_ref[...] = jnp.zeros_like(acc_ref)

    @pl.when(p == 0)
    def _():
        # Chunk means over the full spatial extent, then the chunk's FC1 partial.
        y_k = jnp.sum(x_ref[...], axis=-1, dtype=jnp.float32) * (1.0 / hw_total)  # (1, Cc)
        w1_k = w1_ref[0].astype(jnp.float32)                                       # (Cr, Cc)
        acc_ref[...] += lax.dot_general(
            y_k, w1_k, dimension_numbers=(((1,), (1,)), ((), ())),
            preferred_element_type=jnp.float32,
            precision=lax.Precision.HIGHEST)                                       # (1, Cr)

    @pl.when(p == 1)
    def _():
        h = jnp.maximum(acc_ref[...], 0.0)                                          # (1, Cr)
        w2_k = w2_ref[0].astype(jnp.float32)                                        # (Cr, Cc)
        s_k = jnp.dot(h, w2_k, preferred_element_type=jnp.float32,
                      precision=lax.Precision.HIGHEST)                              # (1, Cc)
        g = jax.nn.sigmoid(s_k)[:, :, None].astype(o_ref.dtype)                     # (1, Cc, 1)
        o_ref[...] = (x_ref[...] * g).astype(o_ref.dtype)


# --------------------------------------------------------------------------
# Sizing helpers (padding- and generation-aware)
# --------------------------------------------------------------------------
def _round_up(x, m):
    return (x + m - 1) // m * m


def _padded_tile_bytes(sub, lane, dtype):
    """Bytes of a (sub, lane) tile after (sublane, 128)-lane padding."""
    itemsize = jnp.dtype(dtype).itemsize
    sub_mult = 8 * max(4 // itemsize, 1)       # 8 for f32, 16 for bf16, 32 for i8
    return _round_up(max(sub, 1), sub_mult) * _round_up(max(lane, 1), 128) * itemsize


def _vmem_budget_info():
    """Returns (budget_bytes, prefer_even_grid_steps, capacity_bytes)."""
    try:
        cap = int(pltpu.get_tpu_info().vmem_capacity_bytes)
    except Exception:
        cap = 64 << 20                         # conservative (v7x per-core size)
    if cap <= (64 << 20):                      # v7x-like: 64 MiB/TC, 2 TCs split batch axis
        return min(44 << 20, (cap * 7) // 10), True, cap
    return 64 << 20, False, cap                # v5e/v6e: 128 MiB physical, single TC


def _choose_bt(batch, item_bytes, fixed_bytes, budget, prefer_even_steps):
    """Largest divisor Bt of batch whose footprint fits the budget."""
    divisors = [d for d in range(1, batch + 1) if batch % d == 0]
    fits = [d for d in divisors if d * item_bytes + fixed_bytes <= budget]
    if not fits:
        return None
    if prefer_even_steps:
        even = [d for d in fits if (batch // d) % 2 == 0]
        if even:
            return max(even)
    return max(fits)


def _choose_cc(C, HW, Cr, x_dtype, w_dtype, headroom, budget):
    """Largest channel-chunk Cc (divisor of C, multiple of 8) that fits."""
    fits = []
    for d in range(8, C, 8):
        if C % d:
            continue
        need = (4 * _padded_tile_bytes(d, HW, x_dtype)         # in + out, double-buffered
                + 4 * _padded_tile_bytes(Cr, d, w_dtype)       # two chunked weights, 2 bufs
                + _padded_tile_bytes(1, Cr, jnp.float32)       # acc scratch
                + headroom)
        if need <= budget:
            fits.append(d)
    return max(fits) if fits else None


# --------------------------------------------------------------------------
# Wrapper
# --------------------------------------------------------------------------
def se_layer(x_nchw, w1, w2t, *, vmem_budget_bytes=None):
    """Squeeze-and-Excitation forward.

    x_nchw: (B, C, H, W) activations, PyTorch NCHW layout (kept end-to-end).
    w1    : (Cr, C)  == fc1.weight            (Cr = C // reduction).
    w2t   : (Cr, C)  == fc2.weight.T          (fc2.weight is (C, Cr)).
    """
    B, C, H, W = x_nchw.shape
    HW = H * W
    Cr = w1.shape[0]
    dtype = x_nchw.dtype
    itemsize = jnp.dtype(dtype).itemsize

    budget, prefer_even, cap = _vmem_budget_info()
    if vmem_budget_bytes is not None:
        budget = int(vmem_budget_bytes)
    vmem_limit = int(min(max(budget + (8 << 20), 32 << 20), cap))

    x_in = x_nchw.reshape(B, C, HW)            # no activation transposes anywhere

    headroom = 1 << 20                         # excite temps + compiler scratch
    fixed_bytes = 2 * 2 * _padded_tile_bytes(Cr, C, w1.dtype) + headroom
    item_bytes = (4 * _padded_tile_bytes(C, HW, dtype)          # in + out, double-buffered
                  + 3 * _padded_tile_bytes(1, C, jnp.float32))  # y / gate temporaries

    bt = _choose_bt(B, item_bytes, fixed_bytes, budget, prefer_even)
    cc = None
    if bt is None:
        cc = _choose_cc(C, HW, Cr, dtype, w1.dtype, headroom, budget)
        if cc is None:
            # TODO(synk): slabs where a single (C, HW) block exceeds VMEM and C has
            # no chunkable divisor are not tiled further (best-effort fused below).
            bt = 1
            vmem_limit = int(cap)

    if bt is not None:
        # ----- fused single-pass path -----
        out = pl.pallas_call(
            _se_kernel_fused,
            out_shape=jax.ShapeDtypeStruct((B, C, HW), dtype),
            grid_spec=pltpu.PrefetchScalarGridSpec(
                num_scalar_prefetch=0,
                grid=(B // bt,),
                in_specs=[
                    pl.BlockSpec((bt, C, HW), lambda b: (b, 0, 0)),
                    pl.BlockSpec((Cr, C), lambda b: (0, 0)),
                    pl.BlockSpec((Cr, C), lambda b: (0, 0)),
                ],
                out_specs=pl.BlockSpec((bt, C, HW), lambda b: (b, 0, 0)),
            ),
            compiler_params=pltpu.CompilerParams(
                dimension_semantics=("parallel",),
                vmem_limit_bytes=vmem_limit,
            ),
            cost_estimate=pl.CostEstimate(
                flops=int(2 * B * C * HW + 4 * B * C * Cr),
                transcendentals=int(B * C),
                bytes_accessed=int(2 * B * C * HW * itemsize),
            ),
        )(x_in, w1, w2t)
        return out.reshape(B, C, H, W)

    # ----- C-chunked two-phase fallback path -----
    nk = C // cc
    # Re-block the tiny weights per channel chunk: (Cr, C) -> (nk, Cr, Cc).
    # (Tiny one-off reshuffle; the big activation slabs are never transposed.)
    w1b = w1.reshape(Cr, nk, cc).transpose(1, 0, 2)
    w2b = w2t.reshape(Cr, nk, cc).transpose(1, 0, 2)

    out = pl.pallas_call(
        functools.partial(_se_kernel_split, HW),
        out_shape=jax.ShapeDtypeStruct((B, C, HW), dtype),
        grid_spec=pltpu.PrefetchScalarGridSpec(
            num_scalar_prefetch=0,
            grid=(B, 2, nk),
            in_specs=[
                pl.BlockSpec((1, cc, HW), lambda b, p, k: (b, k, 0)),
                pl.BlockSpec((1, Cr, cc), lambda b, p, k: (k, 0, 0)),
                pl.BlockSpec((1, Cr, cc), lambda b, p, k: (k, 0, 0)),
            ],
            # Phase 0 pins the output block to chunk 0 (never written, never
            # flushed); phase 1 writes chunk k and it is flushed once.
            out_specs=pl.BlockSpec((1, cc, HW), lambda b, p, k: (b, k * p, 0)),
            scratch_shapes=[pltpu.VMEM((1, Cr), jnp.float32)],
        ),
        compiler_params=pltpu.CompilerParams(
            dimension_semantics=("parallel", "arbitrary", "arbitrary"),
            vmem_limit_bytes=vmem_limit,
        ),
        cost_estimate=pl.CostEstimate(
            flops=int(2 * B * C * HW + 4 * B * C * Cr),
            transcendentals=int(B * C),
            bytes_accessed=int(3 * B * C * HW * itemsize),
        ),
    )(x_in, w1b, w2b)
    return out.reshape(B, C, H, W)


# --------------------------------------------------------------------------
# Pure-JAX reference (mirrors the PyTorch module)
# --------------------------------------------------------------------------
def _reference(x, w1, w2t):
    y = jnp.mean(x, axis=(2, 3))                 # (B, C)
    h = jnp.maximum(y @ w1.T, 0.0)               # (B, Cr)
    s = jax.nn.sigmoid(h @ w2t)                  # (B, C)
    return x * s[:, :, None, None]


if __name__ == "__main__":
    root = jax.random.PRNGKey(0)
    cases = [
        # (B, C, H, W, reduction, forced_vmem_budget)
        (2, 32, 16, 16, 16, None),        # toy SELayer(32, 16): fused path
        (4, 128, 7, 7, 16, None),         # SE-ResNet tail block (HW=49): fused path
        (2, 256, 32, 32, 16, 3 << 20),    # tiny forced budget: exercises split path
    ]
    for i, (B, C, H, W, r, forced_budget) in enumerate(cases):
        kx, k1, k2 = jax.random.split(jax.random.fold_in(root, i), 3)
        Cr = max(C // r, 1)
        x = jax.random.normal(kx, (B, C, H, W), dtype=jnp.float32)
        # fc1.weight: (Cr, C);  fc2.weight.T: (Cr, C).
        w1 = jax.random.normal(k1, (Cr, C), dtype=jnp.float32) * (1.0 / jnp.sqrt(jnp.float32(C)))
        w2t = jax.random.normal(k2, (Cr, C), dtype=jnp.float32) * (1.0 / jnp.sqrt(jnp.float32(Cr)))

        out = se_layer(x, w1, w2t, vmem_budget_bytes=forced_budget)
        jax.block_until_ready(out)

        ref = _reference(x, w1, w2t)
        assert jnp.allclose(out, ref, atol=2e-5, rtol=2e-5), f"mismatch vs reference (case {i})"

    print("KERNEL_OK")
</pallas_src>

<mosaic_0001>
module attributes {stable_mosaic.version = 11 : i64} {
  func.func @_se_kernel_fused(%arg0: i32, %arg1: memref<1x32x256xf32, #tpu.memory_space<vmem>>, %arg2: memref<2x32xf32, #tpu.memory_space<vmem>>, %arg3: memref<2x32xf32, #tpu.memory_space<vmem>>, %arg4: memref<1x32x256xf32, #tpu.memory_space<vmem>>) attributes {dimension_semantics = [#tpu.dimension_semantics<parallel>], iteration_bounds = array<i64: 2>, scalar_prefetch = 0 : i64, scratch_operands = 0 : i64, tpu.core_type = #tpu.core_type<tc>, window_params = [{transform_indices = @transform_0, window_bounds = array<i64: 1, 32, 256>}, {pipeline_mode = #tpu.pipeline_mode<synchronous>, transform_indices = @transform_1, window_bounds = array<i64: 2, 32>}, {pipeline_mode = #tpu.pipeline_mode<synchronous>, transform_indices = @transform_2, window_bounds = array<i64: 2, 32>}, {transform_indices = @transform_3, window_bounds = array<i64: 1, 32, 256>}]} {
    %c0 = arith.constant 0 : index
    %c0_0 = arith.constant 0 : index
    %c0_1 = arith.constant 0 : index
    %0 = vector.load %arg1[%c0, %c0_0, %c0_1] : memref<1x32x256xf32, #tpu.memory_space<vmem>>, vector<1x32x256xf32>
    %cst = arith.constant dense<0.000000e+00> : vector<1x32xf32>
    %1 = vector.multi_reduction <add>, %0, %cst [2] : vector<1x32x256xf32> to vector<1x32xf32>
    %cst_2 = arith.constant 3.906250e-03 : f32
    %2 = vector.broadcast %cst_2 : f32 to vector<1x32xf32>
    %3 = arith.mulf %1, %2 : vector<1x32xf32>
    %c0_3 = arith.constant 0 : index
    %c0_4 = arith.constant 0 : index
    %4 = vector.load %arg2[%c0_3, %c0_4] : memref<2x32xf32, #tpu.memory_space<vmem>>, vector<2x32xf32>
    %c0_5 = arith.constant 0 : index
    %c0_6 = arith.constant 0 : index
    %5 = vector.load %arg3[%c0_5, %c0_6] : memref<2x32xf32, #tpu.memory_space<vmem>>, vector<2x32xf32>
    %cst_7 = arith.constant dense<0.000000e+00> : vector<1x2xf32>
    %6 = tpu.matmul %3, %4, %cst_7 {dimension_numbers = #tpu.dot_dimension_numbers<[1], [1], [0], [0], [0, 0, 1, 0], [], []>, precision = #tpu.contract_precision<fp32>} : vector<1x32xf32>, vector<2x32xf32>, vector<1x2xf32> -> vector<1x2xf32>
    %cst_8 = arith.constant 0.000000e+00 : f32
    %7 = vector.broadcast %cst_8 : f32 to vector<1x2xf32>
    %8 = arith.maximumf %6, %7 : vector<1x2xf32>
    %cst_9 = arith.constant dense<0.000000e+00> : vector<1x32xf32>
    %9 = tpu.matmul %8, %5, %cst_9 {dimension_numbers = #tpu.dot_dimension_numbers<[1], [0], [0], [1], [0, 0, 1, 1], [], []>, precision = #tpu.contract_precision<fp32>} : vector<1x2xf32>, vector<2x32xf32>, vector<1x32xf32> -> vector<1x32xf32>
    %10 = arith.negf %9 : vector<1x32xf32>
    %11 = math.exp %10 : vector<1x32xf32>
    %cst_10 = arith.constant 1.000000e+00 : f32
    %12 = vector.broadcast %cst_10 : f32 to vector<1x32xf32>
    %13 = arith.addf %12, %11 : vector<1x32xf32>
    %14 = arith.divf %12, %13 : vector<1x32xf32>
    %15 = vector.shape_cast %14 : vector<1x32xf32> to vector<1x32x1xf32>
    %c0_11 = arith.constant 0 : index
    %c0_12 = arith.constant 0 : index
    %c0_13 = arith.constant 0 : index
    %16 = vector.load %arg1[%c0_11, %c0_12, %c0_13] : memref<1x32x256xf32, #tpu.memory_space<vmem>>, vector<1x32x256xf32>
    %17 = vector.broadcast %15 : vector<1x32x1xf32> to vector<1x32x256xf32>
    %18 = arith.mulf %16, %17 : vector<1x32x256xf32>
    %c0_14 = arith.constant 0 : index
    %c0_15 = arith.constant 0 : index
    %c0_16 = arith.constant 0 : index
    %19 = vector.load %arg4[%c0_14, %c0_15, %c0_16] : memref<1x32x256xf32, #tpu.memory_space<vmem>>, vector<1x32x256xf32>
    tpu.vector_store %arg4[%c0_14, %c0_15, %c0_16], %18 {strides = array<i32>} : memref<1x32x256xf32, #tpu.memory_space<vmem>>, vector<1x32x256xf32>,
    return
  }
  func.func @transform_0(%arg0: i32) -> (i32, i32, i32) {
    %c0_i32 = arith.constant 0 : i32
    %c0_i32_0 = arith.constant 0 : i32
    %c0_i32_1 = arith.constant 0 : i32
    return %arg0, %c0_i32, %c0_i32_0 : i32, i32, i32
  }
  func.func @transform_1(%arg0: i32) -> (i32, i32) {
    %c0_i32 = arith.constant 0 : i32
    %c0_i32_0 = arith.constant 0 : i32
    %c0_i32_1 = arith.constant 0 : i32
    return %c0_i32, %c0_i32_0 : i32, i32
  }
  func.func @transform_2(%arg0: i32) -> (i32, i32) {
    %c0_i32 = arith.constant 0 : i32
    %c0_i32_0 = arith.constant 0 : i32
    %c0_i32_1 = arith.constant 0 : i32
    return %c0_i32, %c0_i32_0 : i32, i32
  }
  func.func @transform_3(%arg0: i32) -> (i32, i32, i32) {
    %c0_i32 = arith.constant 0 : i32
    %c0_i32_0 = arith.constant 0 : i32
    %c0_i32_1 = arith.constant 0 : i32
    return %arg0, %c0_i32, %c0_i32_0 : i32, i32, i32
  }
}

</mosaic_0001>

<llo_original>
// kernel: tpu_custom_call.1
$region0: #{tpu_custom_call.1}
  #allocation0 [shape = 'u32[]', space=smem, size = 0x4, offset = 0x4, fixed_abs, tag = 'smem constant byte address 0x4 - core index']
  #allocation1 [shape = 'u32[144,128]{1,0:T(1,128)}', space=vmem, size = 0x12000, scoped, tag = 'internal scratch']
  %s0 = inlined_call_operand.hbm [shape: f32[2,32,256], index: 0, kind: input, shape index: {}]
  %s1 = inlined_call_operand.vmem [shape: f32[2,32], index: 1, kind: input, shape index: {}]
  %s2 = inlined_call_operand.vmem [shape: f32[2,32], index: 2, kind: input, shape index: {}]
  %s3 = inlined_call_operand.hbm [shape: f32[2,32,256], index: 3, kind: output, shape index: {}]
  %s4 = sld [smem:[#allocation0]]
  $region49: #{tpu_custom_call.1} parent=0
    _
  %s6 = ssub.s32 1, %s4
  %s7 = scalar_select 0, %s6, %s4
  $region1: #{tpu_custom_call.1} parent=0
    #allocation2 [shape = 'u8[65536]{0}', space=vmem, size = 0x10000, scoped, tag = 'input window, operand 0']
    #allocation3 [shape = 's32[2]{0}', space=sflag, size = 0x8, scoped, tag = 'scoped memory for tpu_custom_call.1']
    #allocation4 [shape = 's32[2]{0}', space=sflag, size = 0x8, scoped, tag = 'scoped memory for tpu_custom_call.1']
    #allocation5 [shape = 'u8[65536]{0}', space=vmem, size = 0x10000, scoped, tag = 'output window, operand 0']
    %8 = vsyncpa [#allocation3], 0
    %s9 = scalar_lea.sflag [#allocation3], 1
    %10 = vsyncpa %s9, 0
    %11 = vsyncpa [#allocation4], 0
    %s12 = scalar_lea.sflag [#allocation4], 1
    %13 = vsyncpa %s12, 0
    loop: start=0, step=1, limit=4
    $region2: #{tpu_custom_call.1} parent=1 // loop_pre_header
      _
    $region3: #{tpu_custom_call.1} parent=1 // loop_header
      %s15 = sphi 0, %s19
      %p16 = scmp.ge.s32.totalorder %s15, 4
      %s25 = sphi 0, %s27
      %s28 = sphi 0, %s25
      %s29 = sphi 0, %s28
      %s45 = sphi 0, %s29
      %s49 = sphi 0, %s49
      %s51 = sphi 0, %s49
      %s52 = sphi 0, %s51
      %s66 = sphi 0, %s52
      %s70 = sphi 0, %s70
      %s72 = sphi 0, %s70
      %s73 = sphi 0, %s72
      %s87 = sphi 0, %s73
      %s93 = sphi 0, %s95
      %s96 = sphi 0, %s93
      %s97 = sphi 0, %s96
      %s113 = sphi 0, %s97
    $region4: #{tpu_custom_call.1} parent=1 // loop_header_branch
      %18 = sbr.rel (%p16) target = $region8
    $region5: #{tpu_custom_call.1} parent=1 // loop_body
      %s20 = ssub.s32 %s15, 1
      %s21 = ssub.s32 %s15, 2
      %s22 = sadd.s32 %s15, 1
      %s23 = ssub.s32 %s15, %s22
      %p24 = scmp.eq.s32.totalorder %s23, 0
      %s26 = sadd.s32 %s25, 1
      %s27 = scalar_select %p24, %s25, %s26
      %p30 = pneg %p24
      %p31 = scmp.eq.s32.totalorder %s15, 1
      %p32 = por %p30, %p31
      %p33 = scmp.ne.s32.totalorder %s25, %s28
      %p34 = scmp.eq.s32.totalorder %s15, 0
      %p35 = por %p33, %p34
      %p36 = scmp.ne.s32.totalorder %s25, %s28
      %p37 = scmp.eq.s32.totalorder %s20, 1
      %p38 = por %p36, %p37
      %p39 = scmp.ne.s32.totalorder %s28, %s29
      %p40 = scmp.eq.s32.totalorder %s20, 0
      %p41 = por %p39, %p40
      %p42 = scmp.ne.s32.totalorder %s28, %s29
      %p43 = scmp.eq.s32.totalorder %s21, 1
      %p44 = por %p42, %p43
      %p46 = scmp.ne.s32.totalorder %s29, %s45
      %p47 = scmp.eq.s32.totalorder %s21, 0
      %p48 = por %p46, %p47
      %s50 = sadd.s32 %s49, 1
      %p53 = scmp.eq.s32.totalorder %s15, 1
      %p54 = scmp.ne.s32.totalorder %s49, %s51
      %p55 = scmp.eq.s32.totalorder %s15, 0
      %p56 = por %p54, %p55
      %p57 = scmp.ne.s32.totalorder %s49, %s51
      %p58 = scmp.eq.s32.totalorder %s20, 1
      %p59 = por %p57, %p58
      %p60 = scmp.ne.s32.totalorder %s51, %s52
      %p61 = scmp.eq.s32.totalorder %s20, 0
      %p62 = por %p60, %p61
      %p63 = scmp.ne.s32.totalorder %s51, %s52
      %p64 = scmp.eq.s32.totalorder %s21, 1
      %p65 = por %p63, %p64
      %p67 = scmp.ne.s32.totalorder %s52, %s66
      %p68 = scmp.eq.s32.totalorder %s21, 0
      %p69 = por %p67, %p68
      %s71 = sadd.s32 %s70, 1
      %p74 = scmp.eq.s32.totalorder %s15, 1
      %p75 = scmp.ne.s32.totalorder %s70, %s72
      %p76 = scmp.eq.s32.totalorder %s15, 0
      %p77 = por %p75, %p76
      %p78 = scmp.ne.s32.totalorder %s70, %s72
      %p79 = scmp.eq.s32.totalorder %s20, 1
      %p80 = por %p78, %p79
      %p81 = scmp.ne.s32.totalorder %s72, %s73
      %p82 = scmp.eq.s32.totalorder %s20, 0
      %p83 = por %p81, %p82
      %p84 = scmp.ne.s32.totalorder %s72, %s73
      %p85 = scmp.eq.s32.totalorder %s21, 1
      %p86 = por %p84, %p85
      %p88 = scmp.ne.s32.totalorder %s73, %s87
      %p89 = scmp.eq.s32.totalorder %s21, 0
      %p90 = por %p88, %p89
      %s91 = ssub.s32 %s15, %s22
      %p92 = scmp.eq.s32.totalorder %s91, 0
      %s94 = sadd.s32 %s93, 1
      %s95 = scalar_select %p92, %s93, %s94
      %p98 = pneg %p92
      %p99 = scmp.eq.s32.totalorder %s15, 1
      %p100 = por %p98, %p99
      %p101 = scmp.ne.s32.totalorder %s93, %s96
      %p102 = scmp.eq.s32.totalorder %s15, 0
      %p103 = por %p101, %p102
      %p104 = scmp.ne.s32.totalorder %s93, %s96
      %p105 = scmp.eq.s32.totalorder %s20, 1
      %p106 = por %p104, %p105
      %p107 = scmp.ne.s32.totalorder %s96, %s97
      %p108 = scmp.eq.s32.totalorder %s20, 0
      %p109 = por %p107, %p108
      %p110 = scmp.ne.s32.totalorder %s96, %s97
      %p111 = scmp.eq.s32.totalorder %s21, 1
      %p112 = por %p110, %p111
      %p114 = scmp.ne.s32.totalorder %s97, %s113
      %p115 = scmp.eq.s32.totalorder %s21, 0
      %p116 = por %p114, %p115
      %p117 = scmp.le.s32.totalorder 1, %s15
      %p118 = scmp.lt.s32.totalorder %s15, 3
      %p119 = pnand %p117, %p118
      %p120 = pneg %p119
      // Predicated region
      $region9: #{tpu_custom_call.1} parent=5 // pred_check
        _
      $region10: #{tpu_custom_call.1} parent=5 // pred_check_branch
        %122 = sbr.rel (%p119) target = $region12
      $region11: #{tpu_custom_call.1} parent=5 // pred_region
        %s123 = ssub.s32 %s15, 1
        // Predicated region
        $region13: #{tpu_custom_call.1} parent=11 // pred_check
          %p124 = pneg %p62
        $region14: #{tpu_custom_call.1} parent=11 // pred_check_branch
          %126 = sbr.rel (%p124) target = $region16
        $region15: #{tpu_custom_call.1} parent=11 // pred_region
          _
        $region16: #{tpu_custom_call.1} parent=11 // pred_fallthru
          _
        // Predicated region
        $region17: #{tpu_custom_call.1} parent=11 // pred_check
          %p127 = pneg %p83
        $region18: #{tpu_custom_call.1} parent=11 // pred_check_branch
          %129 = sbr.rel (%p127) target = $region20
        $region19: #{tpu_custom_call.1} parent=11 // pred_region
          _
        $region20: #{tpu_custom_call.1} parent=11 // pred_fallthru
          _
      $region12: #{tpu_custom_call.1} parent=5 // pred_fallthru
        _
      %p130 = scmp.lt.s32.totalorder %s15, 2
      // Predicated region
      $region21: #{tpu_custom_call.1} parent=5 // pred_check
        %p131 = pneg %p130
      $region22: #{tpu_custom_call.1} parent=5 // pred_check_branch
        %133 = sbr.rel (%p131) target = $region24
      $region23: #{tpu_custom_call.1} parent=5 // pred_region
        // Predicated region
        $region25: #{tpu_custom_call.1} parent=23 // pred_check
          %p134 = pneg %p35
        $region26: #{tpu_custom_call.1} parent=23 // pred_check_branch
          %136 = sbr.rel (%p134) target = $region28
        $region27: #{tpu_custom_call.1} parent=23 // pred_region
          %s137 = sand.u32 %s25, 1
          %s138 = scalar_lea.sflag [#allocation3], %s137
          %s139 = sand.u32 %s25, 1
          %s140 = smul.addr %s139, 64
          %s141 = scalar_lea.vmem [#allocation2], %s140
          %s143 = ssub.s32 1024, 1024
          %144 = vsyncadd %s138, %s143
          %s145 = smul.addr %s15, 8
          %s146 = smul.addr %s145, 128
          %s147 = scalar_lea.hbm %s0, %s146
          %s148 = sshll.u32 %s141, 4
          %s149 = int_to_ptr.vmem [resolvable:$true] %s148
          %154 = dma.hbm_to_vmem [thread:$0]  %s147, 1024, %s149, %s138, 256, 256, 16
        $region28: #{tpu_custom_call.1} parent=23 // pred_fallthru
          _
      $region24: #{tpu_custom_call.1} parent=5 // pred_fallthru
        _
      %p155 = scmp.le.s32.totalorder 1, %s15
      %p156 = scmp.lt.s32.totalorder %s15, 3
      %p157 = pnand %p155, %p156
      %p158 = pneg %p157
      // Predicated region
      $region29: #{tpu_custom_call.1} parent=5 // pred_check
        _
      $region30: #{tpu_custom_call.1} parent=5 // pred_check_branch
        %160 = sbr.rel (%p157) target = $region32
      $region31: #{tpu_custom_call.1} parent=5 // pred_region
        %s161 = ssub.s32 %s15, 1
        %s162 = sand.u32 %s28, 1
        %s163 = scalar_lea.sflag [#allocation3], %s162
        %s164 = sand.u32 %s28, 1
        %s165 = smul.addr %s164, 64
        %s166 = scalar_lea.vmem [#allocation2], %s165
        // Predicated region
        $region33: #{tpu_custom_call.1} parent=31 // pred_check
          %p167 = pneg %p41
        $region34: #{tpu_custom_call.1} parent=31 // pred_check_branch
          %169 = sbr.rel (%p167) target = $region36
        $region35: #{tpu_custom_call.1} parent=31 // pred_region
          %170 = dma.done %s163, 1024
        $region36: #{tpu_custom_call.1} parent=31 // pred_fallthru
          _
        %s171 = sand.u32 %s28, 1
        %s172 = scalar_lea.sflag [#allocation3], %s171
        %s173 = sand.u32 %s28, 1
        %s174 = smul.addr %s173, 64
        %s175 = scalar_lea.vmem [#allocation2], %s174
        %p176 = pneg %p41
        %p177 = pneg %p38
        %p178 = pneg %p62
        %p179 = pneg %p59
        %p180 = pneg %p83
        %p181 = pneg %p80
        %p182 = pneg %p109
        %p183 = pneg %p106
        %s184 = sand.u32 %s96, 1
        %s185 = scalar_lea.sflag [#allocation4], %s184
        %s186 = sand.u32 %s96, 1
        %s187 = smul.addr %s186, 64
        %s188 = scalar_lea.vmem [#allocation5], %s187
        %v189 = vld [vmem:[%s166] sm:$0xff]
        %v190 = vld [vmem:[%s166 + $0x8] sm:$0xff]
        %v191 = vld [vmem:[%s166 + $0x10] sm:$0xff]
        %v192 = vld [vmem:[%s166 + $0x18] sm:$0xff]
        %v193 = vld [vmem:[%s166 + $0x20] sm:$0xff]
        %v194 = vld [vmem:[%s166 + $0x28] sm:$0xff]
        %v195 = vld [vmem:[%s166 + $0x30] sm:$0xff]
        %v196 = vld [vmem:[%s166 + $0x38] sm:$0xff]
        %v197 = vadd.f32 %v189, %v190
        %198 = vadd.xlane.f32.xlu0 %v197
        %v199 = vpop.xlane.xlu0 %198
        %v200 = vadd.f32 %v191, %v192
        %201 = vadd.xlane.f32.xlu0 %v200
        %v202 = vpop.xlane.xlu0 %201
        %v203 = vadd.f32 %v193, %v194
        %204 = vadd.xlane.f32.xlu0 %v203
        %v205 = vpop.xlane.xlu0 %204
        %v206 = vadd.f32 %v195, %v196
        %207 = vadd.xlane.f32.xlu0 %v206
        %v208 = vpop.xlane.xlu0 %207
        %v209 = vmul.f32 %v199, 0.00390625
        %v210 = vmul.f32 %v202, 0.00390625
        %v211 = vmul.f32 %v205, 0.00390625
        %v212 = vmul.f32 %v208, 0.00390625
        %v213 = vld [vmem:[%s1] sm:$0x3]
        %v214 = vld [vmem:[%s2] sm:$0x3]
        %v219 = vlaneseq
        %v220 = vand.u32 %v219, 127
        %v221 = vlaneseq
        %v222 = vshrl.u32 %v221, 7
        %v223 = vsub.s32 %v220, %v222
        %v224 = vrot.slane %v209, %v223
        %v225 = vadd.s32 %v220, 4294967288
        %v226 = vlaneseq
        %v227 = vshrl.u32 %v226, 7
        %v228 = vsub.s32 %v225, %v227
        %v229 = vrot.slane %v210, %v228
        %vm230 = vcmask 130112
        %v231 = vsel %vm230, %v229, %v224
        %v232 = vadd.s32 %v220, 4294967280
        %v233 = vlaneseq
        %v234 = vshrl.u32 %v233, 7
        %v235 = vsub.s32 %v232, %v234
        %v236 = vrot.slane %v211, %v235
        %vm237 = vcmask 195712
        %v238 = vsel %vm237, %v236, %v231
        %v239 = vadd.s32 %v220, 4294967272
        %v240 = vlaneseq
        %v241 = vshrl.u32 %v240, 7
        %v242 = vsub.s32 %v239, %v241
        %v243 = vrot.slane %v212, %v242
        %vm244 = vcmask 261312
        %v245 = vsel %vm244, %v243, %v238
        %vm246 = vcmask 261120
        %v247 = vsel %vm246, %v245, 0
        %v250 = vsel %vm246, %v213, 0
        %252 = vmatprep.subr.mxu0 0.0
        %v253 = vand.u32 %v250, 4294901760
        %254 = vmatpush1.xpose.msra.mxu0 %v253
        %255 = vmatprep.subr.mxu0 0.0
        %256 = vmatpush1.xpose.msra.mxu0 0.0
        %257 = vmatprep.subr.mxu0 0.0
        %258 = vmatpush1.xpose.msra.mxu0 0.0
        %259 = vmatprep.subr.mxu0 0.0
        %260 = vmatpush1.xpose.msra.mxu0 0.0
        %261 = vmatprep.subr.mxu0 0.0
        %262 = vmatpush1.xpose.msra.mxu0 0.0
        %263 = vmatprep.subr.mxu0 0.0
        %264 = vmatpush1.xpose.msra.mxu0 0.0
        %265 = vmatprep.subr.mxu0 0.0
        %266 = vmatpush1.xpose.msra.mxu0 0.0
        %267 = vmatprep.subr.mxu0 0.0
        %268 = vmatpush1.xpose.msra.mxu0 0.0
        %269 = vmatprep.subr.mxu0 0.0
        %270 = vmatpush1.xpose.msra.mxu0 0.0
        %271 = vmatprep.subr.mxu0 0.0
        %272 = vmatpush1.xpose.msra.mxu0 0.0
        %273 = vmatprep.subr.mxu0 0.0
        %274 = vmatpush1.xpose.msra.mxu0 0.0
        %275 = vmatprep.subr.mxu0 0.0
        %276 = vmatpush1.xpose.msra.mxu0 0.0
        %277 = vmatprep.subr.mxu0 0.0
        %278 = vmatpush1.xpose.msra.mxu0 0.0
        %279 = vmatprep.subr.mxu0 0.0
        %280 = vmatpush1.xpose.msra.mxu0 0.0
        %281 = vmatprep.subr.mxu0 0.0
        %282 = vmatpush1.xpose.msra.mxu0 0.0
        %283 = vmatprep.subr.mxu0 0.0
        %284 = vmatpush1.xpose.msra.mxu0 0.0
        %285 = vmatprep.subr.mxu0 0.0
        %286 = vmatpush1.xpose.msra.mxu0 0.0
        %287 = vmatprep.subr.mxu0 0.0
        %288 = vmatpush1.xpose.msra.mxu0 0.0
        %289 = vmatprep.subr.mxu0 0.0
        %290 = vmatpush1.xpose.msra.mxu0 0.0
        %291 = vmatprep.subr.mxu0 0.0
        %292 = vmatpush1.xpose.msra.mxu0 0.0
        %293 = vmatprep.subr.mxu0 0.0
        %294 = vmatpush1.xpose.msra.mxu0 0.0
        %295 = vmatprep.subr.mxu0 0.0
        %296 = vmatpush1.xpose.msra.mxu0 0.0
        %297 = vmatprep.subr.mxu0 0.0
        %298 = vmatpush1.xpose.msra.mxu0 0.0
        %299 = vmatprep.subr.mxu0 0.0
        %300 = vmatpush1.xpose.msra.mxu0 0.0
        %301 = vmatprep.subr.mxu0 0.0
        %302 = vmatpush1.xpose.msra.mxu0 0.0
        %303 = vmatprep.subr.mxu0 0.0
        %304 = vmatpush1.xpose.msra.mxu0 0.0
        %305 = vmatprep.subr.mxu0 0.0
        %306 = vmatpush1.xpose.msra.mxu0 0.0
        %307 = vmatprep.subr.mxu0 0.0
        %308 = vmatpush1.xpose.msra.mxu0 0.0
        %309 = vmatprep.subr.mxu0 0.0
        %310 = vmatpush1.xpose.msra.mxu0 0.0
        %311 = vmatprep.subr.mxu0 0.0
        %312 = vmatpush1.xpose.msra.mxu0 0.0
        %313 = vmatprep.subr.mxu0 0.0
        %314 = vmatpush1.xpose.msra.mxu0 0.0
        %315 = vmatprep.subr.mxu0 0.0
        %316 = vmatpush1.xpose.msra.mxu0 0.0
        %317 = vmatprep.mubr.f32.mxu0 0.0
        %v318 = vand.u32 %v247, 4294901760
        %v319 = vsub.f32 %v247, %v318
        %v320 = vand.u32 %v319, 4294901760
        %v321 = vsub.f32 %v319, %v320
        %v322 = vand.u32 %v321, 4294901760
        %323 = vmatmul.mubr.f32.gmra.mrb[0].mxu0 %v322
        %v324 = vpop.f32.mrb[0].mxu0
        %v325 = vadd.f32 0.0, %v324
        %v326 = vpop.f32.mrb[0].mxu0
        %327 = vdwg.mxu0
        %328 = vmatprep.subr.mxu0 0.0
        %v329 = vand.u32 %v250, 4294901760
        %v330 = vsub.f32 %v250, %v329
        %v331 = vand.u32 %v330, 4294901760
        %v332 = vsub.f32 %v330, %v331
        %v333 = vand.u32 %v332, 4294901760
        %334 = vmatpush1.xpose.msra.mxu0 %v333
        %335 = vmatprep.subr.mxu0 0.0
        %336 = vmatpush1.xpose.msra.mxu0 0.0
        %337 = vmatprep.subr.mxu0 0.0
        %338 = vmatpush1.xpose.msra.mxu0 0.0
        %339 = vmatprep.subr.mxu0 0.0
        %340 = vmatpush1.xpose.msra.mxu0 0.0
        %341 = vmatprep.subr.mxu0 0.0
        %342 = vmatpush1.xpose.msra.mxu0 0.0
        %343 = vmatprep.subr.mxu0 0.0
        %344 = vmatpush1.xpose.msra.mxu0 0.0
        %345 = vmatprep.subr.mxu0 0.0
        %346 = vmatpush1.xpose.msra.mxu0 0.0
        %347 = vmatprep.subr.mxu0 0.0
        %348 = vmatpush1.xpose.msra.mxu0 0.0
        %349 = vmatprep.subr.mxu0 0.0
        %350 = vmatpush1.xpose.msra.mxu0 0.0
        %351 = vmatprep.subr.mxu0 0.0
        %352 = vmatpush1.xpose.msra.mxu0 0.0
        %353 = vmatprep.subr.mxu0 0.0
        %354 = vmatpush1.xpose.msra.mxu0 0.0
        %355 = vmatprep.subr.mxu0 0.0
        %356 = vmatpush1.xpose.msra.mxu0 0.0
        %357 = vmatprep.subr.mxu0 0.0
        %358 = vmatpush1.xpose.msra.mxu0 0.0
        %359 = vmatprep.subr.mxu0 0.0
        %360 = vmatpush1.xpose.msra.mxu0 0.0
        %361 = vmatprep.subr.mxu0 0.0
        %362 = vmatpush1.xpose.msra.mxu0 0.0
        %363 = vmatprep.subr.mxu0 0.0
        %364 = vmatpush1.xpose.msra.mxu0 0.0
        %365 = vmatprep.subr.mxu0 0.0
        %366 = vmatpush1.xpose.msra.mxu0 0.0
        %367 = vmatprep.subr.mxu0 0.0
        %368 = vmatpush1.xpose.msra.mxu0 0.0
        %369 = vmatprep.subr.mxu0 0.0
        %370 = vmatpush1.xpose.msra.mxu0 0.0
        %371 = vmatprep.subr.mxu0 0.0
        %372 = vmatpush1.xpose.msra.mxu0 0.0
        %373 = vmatprep.subr.mxu0 0.0
        %374 = vmatpush1.xpose.msra.mxu0 0.0
        %375 = vmatprep.subr.mxu0 0.0
        %376 = vmatpush1.xpose.msra.mxu0 0.0
        %377 = vmatprep.subr.mxu0 0.0
        %378 = vmatpush1.xpose.msra.mxu0 0.0
        %379 = vmatprep.subr.mxu0 0.0
        %380 = vmatpush1.xpose.msra.mxu0 0.0
        %381 = vmatprep.subr.mxu0 0.0
        %382 = vmatpush1.xpose.msra.mxu0 0.0
        %383 = vmatprep.subr.mxu0 0.0
        %384 = vmatpush1.xpose.msra.mxu0 0.0
        %385 = vmatprep.subr.mxu0 0.0
        %386 = vmatpush1.xpose.msra.mxu0 0.0
        %387 = vmatprep.subr.mxu0 0.0
        %388 = vmatpush1.xpose.msra.mxu0 0.0
        %389 = vmatprep.subr.mxu0 0.0
        %390 = vmatpush1.xpose.msra.mxu0 0.0
        %391 = vmatprep.subr.mxu0 0.0
        %392 = vmatpush1.xpose.msra.mxu0 0.0
        %393 = vmatprep.subr.mxu0 0.0
        %394 = vmatpush1.xpose.msra.mxu0 0.0
        %395 = vmatprep.subr.mxu0 0.0
        %396 = vmatpush1.xpose.msra.mxu0 0.0
        %397 = vmatprep.mubr.f32.mxu0 0.0
        %v398 = vand.u32 %v247, 4294901760
        %399 = vmatmul.mubr.f32.gmra.mrb[0].mxu0 %v398
        %v400 = vpop.f32.mrb[0].mxu0
        %v401 = vadd.f32 %v325, %v400
        %v402 = vpop.f32.mrb[0].mxu0
        %403 = vdwg.mxu0
        %404 = vmatprep.subr.mxu0 0.0
        %v405 = vand.u32 %v250, 4294901760
        %v406 = vsub.f32 %v250, %v405
        %407 = vmatpush1.xpose.msra.mxu0 %v406
        %408 = vmatprep.subr.mxu0 0.0
        %409 = vmatpush1.xpose.msra.mxu0 0.0
        %410 = vmatprep.subr.mxu0 0.0
        %411 = vmatpush1.xpose.msra.mxu0 0.0
        %412 = vmatprep.subr.mxu0 0.0
        %413 = vmatpush1.xpose.msra.mxu0 0.0
        %414 = vmatprep.subr.mxu0 0.0
        %415 = vmatpush1.xpose.msra.mxu0 0.0
        %416 = vmatprep.subr.mxu0 0.0
        %417 = vmatpush1.xpose.msra.mxu0 0.0
        %418 = vmatprep.subr.mxu0 0.0
        %419 = vmatpush1.xpose.msra.mxu0 0.0
        %420 = vmatprep.subr.mxu0 0.0
        %421 = vmatpush1.xpose.msra.mxu0 0.0
        %422 = vmatprep.subr.mxu0 0.0
        %423 = vmatpush1.xpose.msra.mxu0 0.0
        %424 = vmatprep.subr.mxu0 0.0
        %425 = vmatpush1.xpose.msra.mxu0 0.0
        %426 = vmatprep.subr.mxu0 0.0
        %427 = vmatpush1.xpose.msra.mxu0 0.0
        %428 = vmatprep.subr.mxu0 0.0
        %429 = vmatpush1.xpose.msra.mxu0 0.0
        %430 = vmatprep.subr.mxu0 0.0
        %431 = vmatpush1.xpose.msra.mxu0 0.0
        %432 = vmatprep.subr.mxu0 0.0
        %433 = vmatpush1.xpose.msra.mxu0 0.0
        %434 = vmatprep.subr.mxu0 0.0
        %435 = vmatpush1.xpose.msra.mxu0 0.0
        %436 = vmatprep.subr.mxu0 0.0
        %437 = vmatpush1.xpose.msra.mxu0 0.0
        %438 = vmatprep.subr.mxu0 0.0
        %439 = vmatpush1.xpose.msra.mxu0 0.0
        %440 = vmatprep.subr.mxu0 0.0
        %441 = vmatpush1.xpose.msra.mxu0 0.0
        %442 = vmatprep.subr.mxu0 0.0
        %443 = vmatpush1.xpose.msra.mxu0 0.0
        %444 = vmatprep.subr.mxu0 0.0
        %445 = vmatpush1.xpose.msra.mxu0 0.0
        %446 = vmatprep.subr.mxu0 0.0
        %447 = vmatpush1.xpose.msra.mxu0 0.0
        %448 = vmatprep.subr.mxu0 0.0
        %449 = vmatpush1.xpose.msra.mxu0 0.0
        %450 = vmatprep.subr.mxu0 0.0
        %451 = vmatpush1.xpose.msra.mxu0 0.0
        %452 = vmatprep.subr.mxu0 0.0
        %453 = vmatpush1.xpose.msra.mxu0 0.0
        %454 = vmatprep.subr.mxu0 0.0
        %455 = vmatpush1.xpose.msra.mxu0 0.0
        %456 = vmatprep.subr.mxu0 0.0
        %457 = vmatpush1.xpose.msra.mxu0 0.0
        %458 = vmatprep.subr.mxu0 0.0
        %459 = vmatpush1.xpose.msra.mxu0 0.0
        %460 = vmatprep.subr.mxu0 0.0
        %461 = vmatpush1.xpose.msra.mxu0 0.0
        %462 = vmatprep.subr.mxu0 0.0
        %463 = vmatpush1.xpose.msra.mxu0 0.0
        %464 = vmatprep.subr.mxu0 0.0
        %465 = vmatpush1.xpose.msra.mxu0 0.0
        %466 = vmatprep.subr.mxu0 0.0
        %467 = vmatpush1.xpose.msra.mxu0 0.0
        %468 = vmatprep.subr.mxu0 0.0
        %469 = vmatpush1.xpose.msra.mxu0 0.0
        %470 = vmatprep.mubr.f32.mxu0 0.0
        %v471 = vand.u32 %v247, 4294901760
        %v472 = vsub.f32 %v247, %v471
        %473 = vmatmul.mubr.f32.gmra.mrb[0].mxu0 %v472
        %v474 = vpop.f32.mrb[0].mxu0
        %v475 = vadd.f32 %v401, %v474
        %v476 = vpop.f32.mrb[0].mxu0
        %477 = vdwg.mxu0
        %478 = vmatprep.subr.mxu0 0.0
        %v479 = vand.u32 %v250, 4294901760
        %480 = vmatpush1.xpose.msra.mxu0 %v479
        %481 = vmatprep.subr.mxu0 0.0
        %482 = vmatpush1.xpose.msra.mxu0 0.0
        %483 = vmatprep.subr.mxu0 0.0
        %484 = vmatpush1.xpose.msra.mxu0 0.0
        %485 = vmatprep.subr.mxu0 0.0
        %486 = vmatpush1.xpose.msra.mxu0 0.0
        %487 = vmatprep.subr.mxu0 0.0
        %488 = vmatpush1.xpose.msra.mxu0 0.0
        %489 = vmatprep.subr.mxu0 0.0
        %490 = vmatpush1.xpose.msra.mxu0 0.0
        %491 = vmatprep.subr.mxu0 0.0
        %492 = vmatpush1.xpose.msra.mxu0 0.0
        %493 = vmatprep.subr.mxu0 0.0
        %494 = vmatpush1.xpose.msra.mxu0 0.0
        %495 = vmatprep.subr.mxu0 0.0
        %496 = vmatpush1.xpose.msra.mxu0 0.0
        %497 = vmatprep.subr.mxu0 0.0
        %498 = vmatpush1.xpose.msra.mxu0 0.0
        %499 = vmatprep.subr.mxu0 0.0
        %500 = vmatpush1.xpose.msra.mxu0 0.0
        %501 = vmatprep.subr.mxu0 0.0
        %502 = vmatpush1.xpose.msra.mxu0 0.0
        %503 = vmatprep.subr.mxu0 0.0
        %504 = vmatpush1.xpose.msra.mxu0 0.0
        %505 = vmatprep.subr.mxu0 0.0
        %506 = vmatpush1.xpose.msra.mxu0 0.0
        %507 = vmatprep.subr.mxu0 0.0
        %508 = vmatpush1.xpose.msra.mxu0 0.0
        %509 = vmatprep.subr.mxu0 0.0
        %510 = vmatpush1.xpose.msra.mxu0 0.0
        %511 = vmatprep.subr.mxu0 0.0
        %512 = vmatpush1.xpose.msra.mxu0 0.0
        %513 = vmatprep.subr.mxu0 0.0
        %514 = vmatpush1.xpose.msra.mxu0 0.0
        %515 = vmatprep.subr.mxu0 0.0
        %516 = vmatpush1.xpose.msra.mxu0 0.0
        %517 = vmatprep.subr.mxu0 0.0
        %518 = vmatpush1.xpose.msra.mxu0 0.0
        %519 = vmatprep.subr.mxu0 0.0
        %520 = vmatpush1.xpose.msra.mxu0 0.0
        %521 = vmatprep.subr.mxu0 0.0
        %522 = vmatpush1.xpose.msra.mxu0 0.0
        %523 = vmatprep.subr.mxu0 0.0
        %524 = vmatpush1.xpose.msra.mxu0 0.0
        %525 = vmatprep.subr.mxu0 0.0
        %526 = vmatpush1.xpose.msra.mxu0 0.0
        %527 = vmatprep.subr.mxu0 0.0
        %528 = vmatpush1.xpose.msra.mxu0 0.0
        %529 = vmatprep.subr.mxu0 0.0
        %530 = vmatpush1.xpose.msra.mxu0 0.0
        %531 = vmatprep.subr.mxu0 0.0
        %532 = vmatpush1.xpose.msra.mxu0 0.0
        %533 = vmatprep.subr.mxu0 0.0
        %534 = vmatpush1.xpose.msra.mxu0 0.0
        %535 = vmatprep.subr.mxu0 0.0
        %536 = vmatpush1.xpose.msra.mxu0 0.0
        %537 = vmatprep.subr.mxu0 0.0
        %538 = vmatpush1.xpose.msra.mxu0 0.0
        %539 = vmatprep.subr.mxu0 0.0
        %540 = vmatpush1.xpose.msra.mxu0 0.0
        %541 = vmatprep.subr.mxu0 0.0
        %542 = vmatpush1.xpose.msra.mxu0 0.0
        %543 = vmatprep.mubr.f32.mxu0 0.0
        %v544 = vand.u32 %v247, 4294901760
        %v545 = vsub.f32 %v247, %v544
        %v546 = vand.u32 %v545, 4294901760
        %547 = vmatmul.mubr.f32.gmra.mrb[0].mxu0 %v546
        %v548 = vpop.f32.mrb[0].mxu0
        %v549 = vadd.f32 %v475, %v548
        %v550 = vpop.f32.mrb[0].mxu0
        %551 = vdwg.mxu0
        %552 = vmatprep.subr.mxu0 0.0
        %v553 = vand.u32 %v250, 4294901760
        %v554 = vsub.f32 %v250, %v553
        %v555 = vand.u32 %v554, 4294901760
        %556 = vmatpush1.xpose.msra.mxu0 %v555
        %557 = vmatprep.subr.mxu0 0.0
        %558 = vmatpush1.xpose.msra.mxu0 0.0
        %559 = vmatprep.subr.mxu0 0.0
        %560 = vmatpush1.xpose.msra.mxu0 0.0
        %561 = vmatprep.subr.mxu0 0.0
        %562 = vmatpush1.xpose.msra.mxu0 0.0
        %563 = vmatprep.subr.mxu0 0.0
        %564 = vmatpush1.xpose.msra.mxu0 0.0
        %565 = vmatprep.subr.mxu0 0.0
        %566 = vmatpush1.xpose.msra.mxu0 0.0
        %567 = vmatprep.subr.mxu0 0.0
        %568 = vmatpush1.xpose.msra.mxu0 0.0
        %569 = vmatprep.subr.mxu0 0.0
        %570 = vmatpush1.xpose.msra.mxu0 0.0
        %571 = vmatprep.subr.mxu0 0.0
        %572 = vmatpush1.xpose.msra.mxu0 0.0
        %573 = vmatprep.subr.mxu0 0.0
        %574 = vmatpush1.xpose.msra.mxu0 0.0
        %575 = vmatprep.subr.mxu0 0.0
        %576 = vmatpush1.xpose.msra.mxu0 0.0
        %577 = vmatprep.subr.mxu0 0.0
        %578 = vmatpush1.xpose.msra.mxu0 0.0
        %579 = vmatprep.subr.mxu0 0.0
        %580 = vmatpush1.xpose.msra.mxu0 0.0
        %581 = vmatprep.subr.mxu0 0.0
        %582 = vmatpush1.xpose.msra.mxu0 0.0
        %583 = vmatprep.subr.mxu0 0.0
        %584 = vmatpush1.xpose.msra.mxu0 0.0
        %585 = vmatprep.subr.mxu0 0.0
        %586 = vmatpush1.xpose.msra.mxu0 0.0
        %587 = vmatprep.subr.mxu0 0.0
        %588 = vmatpush1.xpose.msra.mxu0 0.0
        %589 = vmatprep.subr.mxu0 0.0
        %590 = vmatpush1.xpose.msra.mxu0 0.0
        %591 = vmatprep.subr.mxu0 0.0
        %592 = vmatpush1.xpose.msra.mxu0 0.0
        %593 = vmatprep.subr.mxu0 0.0
        %594 = vmatpush1.xpose.msra.mxu0 0.0
        %595 = vmatprep.subr.mxu0 0.0
        %596 = vmatpush1.xpose.msra.mxu0 0.0
        %597 = vmatprep.subr.mxu0 0.0
        %598 = vmatpush1.xpose.msra.mxu0 0.0
        %599 = vmatprep.subr.mxu0 0.0
        %600 = vmatpush1.xpose.msra.mxu0 0.0
        %601 = vmatprep.subr.mxu0 0.0
        %602 = vmatpush1.xpose.msra.mxu0 0.0
        %603 = vmatprep.subr.mxu0 0.0
        %604 = vmatpush1.xpose.msra.mxu0 0.0
        %605 = vmatprep.subr.mxu0 0.0
        %606 = vmatpush1.xpose.msra.mxu0 0.0
        %607 = vmatprep.subr.mxu0 0.0
        %608 = vmatpush1.xpose.msra.mxu0 0.0
        %609 = vmatprep.subr.mxu0 0.0
        %610 = vmatpush1.xpose.msra.mxu0 0.0
        %611 = vmatprep.subr.mxu0 0.0
        %612 = vmatpush1.xpose.msra.mxu0 0.0
        %613 = vmatprep.subr.mxu0 0.0
        %614 = vmatpush1.xpose.msra.mxu0 0.0
        %615 = vmatprep.subr.mxu0 0.0
        %616 = vmatpush1.xpose.msra.mxu0 0.0
        %617 = vmatprep.subr.mxu0 0.0
        %618 = vmatpush1.xpose.msra.mxu0 0.0
        %619 = vmatprep.mubr.f32.mxu0 0.0
        %v620 = vand.u32 %v247, 4294901760
        %621 = vmatmul.mubr.f32.gmra.mrb[0].mxu0 %v620
        %v622 = vpop.f32.mrb[0].mxu0
        %v623 = vadd.f32 %v549, %v622
        %v624 = vpop.f32.mrb[0].mxu0
        %625 = vdwg.mxu0
        %626 = vmatprep.subr.mxu0 0.0
        %v627 = vand.u32 %v250, 4294901760
        %628 = vmatpush1.xpose.msra.mxu0 %v627
        %629 = vmatprep.subr.mxu0 0.0
        %630 = vmatpush1.xpose.msra.mxu0 0.0
        %631 = vmatprep.subr.mxu0 0.0
        %632 = vmatpush1.xpose.msra.mxu0 0.0
        %633 = vmatprep.subr.mxu0 0.0
        %634 = vmatpush1.xpose.msra.mxu0 0.0
        %635 = vmatprep.subr.mxu0 0.0
        %636 = vmatpush1.xpose.msra.mxu0 0.0
        %637 = vmatprep.subr.mxu0 0.0
        %638 = vmatpush1.xpose.msra.mxu0 0.0
        %639 = vmatprep.subr.mxu0 0.0
        %640 = vmatpush1.xpose.msra.mxu0 0.0
        %641 = vmatprep.subr.mxu0 0.0
        %642 = vmatpush1.xpose.msra.mxu0 0.0
        %643 = vmatprep.subr.mxu0 0.0
        %644 = vmatpush1.xpose.msra.mxu0 0.0
        %645 = vmatprep.subr.mxu0 0.0
        %646 = vmatpush1.xpose.msra.mxu0 0.0
        %647 = vmatprep.subr.mxu0 0.0
        %648 = vmatpush1.xpose.msra.mxu0 0.0
        %649 = vmatprep.subr.mxu0 0.0
        %650 = vmatpush1.xpose.msra.mxu0 0.0
        %651 = vmatprep.subr.mxu0 0.0
        %652 = vmatpush1.xpose.msra.mxu0 0.0
        %653 = vmatprep.subr.mxu0 0.0
        %654 = vmatpush1.xpose.msra.mxu0 0.0
        %655 = vmatprep.subr.mxu0 0.0
        %656 = vmatpush1.xpose.msra.mxu0 0.0
        %657 = vmatprep.subr.mxu0 0.0
        %658 = vmatpush1.xpose.msra.mxu0 0.0
        %659 = vmatprep.subr.mxu0 0.0
        %660 = vmatpush1.xpose.msra.mxu0 0.0
        %661 = vmatprep.subr.mxu0 0.0
        %662 = vmatpush1.xpose.msra.mxu0 0.0
        %663 = vmatprep.subr.mxu0 0.0
        %664 = vmatpush1.xpose.msra.mxu0 0.0
        %665 = vmatprep.subr.mxu0 0.0
        %666 = vmatpush1.xpose.msra.mxu0 0.0
        %667 = vmatprep.subr.mxu0 0.0
        %668 = vmatpush1.xpose.msra.mxu0 0.0
        %669 = vmatprep.subr.mxu0 0.0
        %670 = vmatpush1.xpose.msra.mxu0 0.0
        %671 = vmatprep.subr.mxu0 0.0
        %672 = vmatpush1.xpose.msra.mxu0 0.0
        %673 = vmatprep.subr.mxu0 0.0
        %674 = vmatpush1.xpose.msra.mxu0 0.0
        %675 = vmatprep.subr.mxu0 0.0
        %676 = vmatpush1.xpose.msra.mxu0 0.0
        %677 = vmatprep.subr.mxu0 0.0
        %678 = vmatpush1.xpose.msra.mxu0 0.0
        %679 = vmatprep.subr.mxu0 0.0
        %680 = vmatpush1.xpose.msra.mxu0 0.0
        %681 = vmatprep.subr.mxu0 0.0
        %682 = vmatpush1.xpose.msra.mxu0 0.0
        %683 = vmatprep.subr.mxu0 0.0
        %684 = vmatpush1.xpose.msra.mxu0 0.0
        %685 = vmatprep.subr.mxu0 0.0
        %686 = vmatpush1.xpose.msra.mxu0 0.0
        %687 = vmatprep.subr.mxu0 0.0
        %688 = vmatpush1.xpose.msra.mxu0 0.0
        %689 = vmatprep.subr.mxu0 0.0
        %690 = vmatpush1.xpose.msra.mxu0 0.0
        %691 = vmatprep.mubr.f32.mxu0 0.0
        %v692 = vand.u32 %v247, 4294901760
        %693 = vmatmul.mubr.f32.gmra.mrb[0].mxu0 %v692
        %v694 = vpop.f32.mrb[0].mxu0
        %v695 = vadd.f32 %v623, %v694
        %v696 = vpop.f32.mrb[0].mxu0
        %697 = vdwg.mxu0
        %v698 = vmax.f32 %v695, 0.0
        %vm699 = vcmask 15360
        %v701 = vsel %vm699, %v698, 0
        %vm703 = vcmask 1041408
        %v705 = vsel %vm703, %v214, 0
        %707 = vmatprep.subr.mxu0 0.0
        %v708 = vand.u32 %v705, 4294901760
        %709 = vmatpush1.msra.mxu0 %v708
        %710 = vmatprep.subr.mxu0 0.0
        %711 = vmatpush1.msra.mxu0 0.0
        %712 = vmatprep.subr.mxu0 0.0
        %713 = vmatpush1.msra.mxu0 0.0
        %714 = vmatprep.subr.mxu0 0.0
        %715 = vmatpush1.msra.mxu0 0.0
        %716 = vmatprep.subr.mxu0 0.0
        %717 = vmatpush1.msra.mxu0 0.0
        %718 = vmatprep.subr.mxu0 0.0
        %719 = vmatpush1.msra.mxu0 0.0
        %720 = vmatprep.subr.mxu0 0.0
        %721 = vmatpush1.msra.mxu0 0.0
        %722 = vmatprep.subr.mxu0 0.0
        %723 = vmatpush1.msra.mxu0 0.0
        %724 = vmatprep.subr.mxu0 0.0
        %725 = vmatpush1.msra.mxu0 0.0
        %726 = vmatprep.subr.mxu0 0.0
        %727 = vmatpush1.msra.mxu0 0.0
        %728 = vmatprep.subr.mxu0 0.0
        %729 = vmatpush1.msra.mxu0 0.0
        %730 = vmatprep.subr.mxu0 0.0
        %731 = vmatpush1.msra.mxu0 0.0
        %732 = vmatprep.subr.mxu0 0.0
        %733 = vmatpush1.msra.mxu0 0.0
        %734 = vmatprep.subr.mxu0 0.0
        %735 = vmatpush1.msra.mxu0 0.0
        %736 = vmatprep.subr.mxu0 0.0
        %737 = vmatpush1.msra.mxu0 0.0
        %738 = vmatprep.subr.mxu0 0.0
        %739 = vmatpush1.msra.mxu0 0.0
        %740 = vmatprep.subr.mxu0 0.0
        %741 = vmatpush1.msra.mxu0 0.0
        %742 = vmatprep.subr.mxu0 0.0
        %743 = vmatpush1.msra.mxu0 0.0
        %744 = vmatprep.subr.mxu0 0.0
        %745 = vmatpush1.msra.mxu0 0.0
        %746 = vmatprep.subr.mxu0 0.0
        %747 = vmatpush1.msra.mxu0 0.0
        %748 = vmatprep.subr.mxu0 0.0
        %749 = vmatpush1.msra.mxu0 0.0
        %750 = vmatprep.subr.mxu0 0.0
        %751 = vmatpush1.msra.mxu0 0.0
        %752 = vmatprep.subr.mxu0 0.0
        %753 = vmatpush1.msra.mxu0 0.0
        %754 = vmatprep.subr.mxu0 0.0
        %755 = vmatpush1.msra.mxu0 0.0
        %756 = vmatprep.subr.mxu0 0.0
        %757 = vmatpush1.msra.mxu0 0.0
        %758 = vmatprep.subr.mxu0 0.0
        %759 = vmatpush1.msra.mxu0 0.0
        %760 = vmatprep.subr.mxu0 0.0
        %761 = vmatpush1.msra.mxu0 0.0
        %762 = vmatprep.subr.mxu0 0.0
        %763 = vmatpush1.msra.mxu0 0.0
        %764 = vmatprep.subr.mxu0 0.0
        %765 = vmatpush1.msra.mxu0 0.0
        %766 = vmatprep.subr.mxu0 0.0
        %767 = vmatpush1.msra.mxu0 0.0
        %768 = vmatprep.subr.mxu0 0.0
        %769 = vmatpush1.msra.mxu0 0.0
        %770 = vmatprep.subr.mxu0 0.0
        %771 = vmatpush1.msra.mxu0 0.0
        %772 = vmatprep.mubr.f32.mxu0 0.0
        %v773 = vand.u32 %v701, 4294901760
        %v774 = vsub.f32 %v701, %v773
        %v775 = vand.u32 %v774, 4294901760
        %v776 = vsub.f32 %v774, %v775
        %v777 = vand.u32 %v776, 4294901760
        %778 = vmatmul.mubr.f32.gmra.mrb[0].mxu0 %v777
        %v779 = vpop.f32.mrb[0].mxu0
        %v780 = vadd.f32 0.0, %v779
        %v781 = vpop.f32.mrb[0].mxu0
        %782 = vdwg.mxu0
        %783 = vmatprep.subr.mxu0 0.0
        %v784 = vand.u32 %v705, 4294901760
        %v785 = vsub.f32 %v705, %v784
        %v786 = vand.u32 %v785, 4294901760
        %v787 = vsub.f32 %v785, %v786
        %v788 = vand.u32 %v787, 4294901760
        %789 = vmatpush1.msra.mxu0 %v788
        %790 = vmatprep.subr.mxu0 0.0
        %791 = vmatpush1.msra.mxu0 0.0
        %792 = vmatprep.subr.mxu0 0.0
        %793 = vmatpush1.msra.mxu0 0.0
        %794 = vmatprep.subr.mxu0 0.0
        %795 = vmatpush1.msra.mxu0 0.0
        %796 = vmatprep.subr.mxu0 0.0
        %797 = vmatpush1.msra.mxu0 0.0
        %798 = vmatprep.subr.mxu0 0.0
        %799 = vmatpush1.msra.mxu0 0.0
        %800 = vmatprep.subr.mxu0 0.0
        %801 = vmatpush1.msra.mxu0 0.0
        %802 = vmatprep.subr.mxu0 0.0
        %803 = vmatpush1.msra.mxu0 0.0
        %804 = vmatprep.subr.mxu0 0.0
        %805 = vmatpush1.msra.mxu0 0.0
        %806 = vmatprep.subr.mxu0 0.0
        %807 = vmatpush1.msra.mxu0 0.0
        %808 = vmatprep.subr.mxu0 0.0
        %809 = vmatpush1.msra.mxu0 0.0
        %810 = vmatprep.subr.mxu0 0.0
        %811 = vmatpush1.msra.mxu0 0.0
        %812 = vmatprep.subr.mxu0 0.0
        %813 = vmatpush1.msra.mxu0 0.0
        %814 = vmatprep.subr.mxu0 0.0
        %815 = vmatpush1.msra.mxu0 0.0
        %816 = vmatprep.subr.mxu0 0.0
        %817 = vmatpush1.msra.mxu0 0.0
        %818 = vmatprep.subr.mxu0 0.0
        %819 = vmatpush1.msra.mxu0 0.0
        %820 = vmatprep.subr.mxu0 0.0
        %821 = vmatpush1.msra.mxu0 0.0
        %822 = vmatprep.subr.mxu0 0.0
        %823 = vmatpush1.msra.mxu0 0.0
        %824 = vmatprep.subr.mxu0 0.0
        %825 = vmatpush1.msra.mxu0 0.0
        %826 = vmatprep.subr.mxu0 0.0
        %827 = vmatpush1.msra.mxu0 0.0
        %828 = vmatprep.subr.mxu0 0.0
        %829 = vmatpush1.msra.mxu0 0.0
        %830 = vmatprep.subr.mxu0 0.0
        %831 = vmatpush1.msra.mxu0 0.0
        %832 = vmatprep.subr.mxu0 0.0
        %833 = vmatpush1.msra.mxu0 0.0
        %834 = vmatprep.subr.mxu0 0.0
        %835 = vmatpush1.msra.mxu0 0.0
        %836 = vmatprep.subr.mxu0 0.0
        %837 = vmatpush1.msra.mxu0 0.0
        %838 = vmatprep.subr.mxu0 0.0
        %839 = vmatpush1.msra.mxu0 0.0
        %840 = vmatprep.subr.mxu0 0.0
        %841 = vmatpush1.msra.mxu0 0.0
        %842 = vmatprep.subr.mxu0 0.0
        %843 = vmatpush1.msra.mxu0 0.0
        %844 = vmatprep.subr.mxu0 0.0
        %845 = vmatpush1.msra.mxu0 0.0
        %846 = vmatprep.subr.mxu0 0.0
        %847 = vmatpush1.msra.mxu0 0.0
        %848 = vmatprep.subr.mxu0 0.0
        %849 = vmatpush1.msra.mxu0 0.0
        %850 = vmatprep.subr.mxu0 0.0
        %851 = vmatpush1.msra.mxu0 0.0
        %852 = vmatprep.mubr.f32.mxu0 0.0
        %v853 = vand.u32 %v701, 4294901760
        %854 = vmatmul.mubr.f32.gmra.mrb[0].mxu0 %v853
        %v855 = vpop.f32.mrb[0].mxu0
        %v856 = vadd.f32 %v780, %v855
        %v857 = vpop.f32.mrb[0].mxu0
        %858 = vdwg.mxu0
        %859 = vmatprep.subr.mxu0 0.0
        %v860 = vand.u32 %v705, 4294901760
        %v861 = vsub.f32 %v705, %v860
        %862 = vmatpush1.msra.mxu0 %v861
        %863 = vmatprep.subr.mxu0 0.0
        %864 = vmatpush1.msra.mxu0 0.0
        %865 = vmatprep.subr.mxu0 0.0
        %866 = vmatpush1.msra.mxu0 0.0
        %867 = vmatprep.subr.mxu0 0.0
        %868 = vmatpush1.msra.mxu0 0.0
        %869 = vmatprep.subr.mxu0 0.0
        %870 = vmatpush1.msra.mxu0 0.0
        %871 = vmatprep.subr.mxu0 0.0
        %872 = vmatpush1.msra.mxu0 0.0
        %873 = vmatprep.subr.mxu0 0.0
        %874 = vmatpush1.msra.mxu0 0.0
        %875 = vmatprep.subr.mxu0 0.0
        %876 = vmatpush1.msra.mxu0 0.0
        %877 = vmatprep.subr.mxu0 0.0
        %878 = vmatpush1.msra.mxu0 0.0
        %879 = vmatprep.subr.mxu0 0.0
        %880 = vmatpush1.msra.mxu0 0.0
        %881 = vmatprep.subr.mxu0 0.0
        %882 = vmatpush1.msra.mxu0 0.0
        %883 = vmatprep.subr.mxu0 0.0
        %884 = vmatpush1.msra.mxu0 0.0
        %885 = vmatprep.subr.mxu0 0.0
        %886 = vmatpush1.msra.mxu0 0.0
        %887 = vmatprep.subr.mxu0 0.0
        %888 = vmatpush1.msra.mxu0 0.0
        %889 = vmatprep.subr.mxu0 0.0
        %890 = vmatpush1.msra.mxu0 0.0
        %891 = vmatprep.subr.mxu0 0.0
        %892 = vmatpush1.msra.mxu0 0.0
        %893 = vmatprep.subr.mxu0 0.0
        %894 = vmatpush1.msra.mxu0 0.0
        %895 = vmatprep.subr.mxu0 0.0
        %896 = vmatpush1.msra.mxu0 0.0
        %897 = vmatprep.subr.mxu0 0.0
        %898 = vmatpush1.msra.mxu0 0.0
        %899 = vmatprep.subr.mxu0 0.0
        %900 = vmatpush1.msra.mxu0 0.0
        %901 = vmatprep.subr.mxu0 0.0
        %902 = vmatpush1.msra.mxu0 0.0
        %903 = vmatprep.subr.mxu0 0.0
        %904 = vmatpush1.msra.mxu0 0.0
        %905 = vmatprep.subr.mxu0 0.0
        %906 = vmatpush1.msra.mxu0 0.0
        %907 = vmatprep.subr.mxu0 0.0
        %908 = vmatpush1.msra.mxu0 0.0
        %909 = vmatprep.subr.mxu0 0.0
        %910 = vmatpush1.msra.mxu0 0.0
        %911 = vmatprep.subr.mxu0 0.0
        %912 = vmatpush1.msra.mxu0 0.0
        %913 = vmatprep.subr.mxu0 0.0
        %914 = vmatpush1.msra.mxu0 0.0
        %915 = vmatprep.subr.mxu0 0.0
        %916 = vmatpush1.msra.mxu0 0.0
        %917 = vmatprep.subr.mxu0 0.0
        %918 = vmatpush1.msra.mxu0 0.0
        %919 = vmatprep.subr.mxu0 0.0
        %920 = vmatpush1.msra.mxu0 0.0
        %921 = vmatprep.subr.mxu0 0.0
        %922 = vmatpush1.msra.mxu0 0.0
        %923 = vmatprep.subr.mxu0 0.0
        %924 = vmatpush1.msra.mxu0 0.0
        %925 = vmatprep.mubr.f32.mxu0 0.0
        %v926 = vand.u32 %v701, 4294901760
        %v927 = vsub.f32 %v701, %v926
        %928 = vmatmul.mubr.f32.gmra.mrb[0].mxu0 %v927
        %v929 = vpop.f32.mrb[0].mxu0
        %v930 = vadd.f32 %v856, %v929
        %v931 = vpop.f32.mrb[0].mxu0
        %932 = vdwg.mxu0
        %933 = vmatprep.subr.mxu0 0.0
        %v934 = vand.u32 %v705, 4294901760
        %935 = vmatpush1.msra.mxu0 %v934
        %936 = vmatprep.subr.mxu0 0.0
        %937 = vmatpush1.msra.mxu0 0.0
        %938 = vmatprep.subr.mxu0 0.0
        %939 = vmatpush1.msra.mxu0 0.0
        %940 = vmatprep.subr.mxu0 0.0
        %941 = vmatpush1.msra.mxu0 0.0
        %942 = vmatprep.subr.mxu0 0.0
        %943 = vmatpush1.msra.mxu0 0.0
        %944 = vmatprep.subr.mxu0 0.0
        %945 = vmatpush1.msra.mxu0 0.0
        %946 = vmatprep.subr.mxu0 0.0
        %947 = vmatpush1.msra.mxu0 0.0
        %948 = vmatprep.subr.mxu0 0.0
        %949 = vmatpush1.msra.mxu0 0.0
        %950 = vmatprep.subr.mxu0 0.0
        %951 = vmatpush1.msra.mxu0 0.0
        %952 = vmatprep.subr.mxu0 0.0
        %953 = vmatpush1.msra.mxu0 0.0
        %954 = vmatprep.subr.mxu0 0.0
        %955 = vmatpush1.msra.mxu0 0.0
        %956 = vmatprep.subr.mxu0 0.0
        %957 = vmatpush1.msra.mxu0 0.0
        %958 = vmatprep.subr.mxu0 0.0
        %959 = vmatpush1.msra.mxu0 0.0
        %960 = vmatprep.subr.mxu0 0.0
        %961 = vmatpush1.msra.mxu0 0.0
        %962 = vmatprep.subr.mxu0 0.0
        %963 = vmatpush1.msra.mxu0 0.0
        %964 = vmatprep.subr.mxu0 0.0
        %965 = vmatpush1.msra.mxu0 0.0
        %966 = vmatprep.subr.mxu0 0.0
        %967 = vmatpush1.msra.mxu0 0.0
        %968 = vmatprep.subr.mxu0 0.0
        %969 = vmatpush1.msra.mxu0 0.0
        %970 = vmatprep.subr.mxu0 0.0
        %971 = vmatpush1.msra.mxu0 0.0
        %972 = vmatprep.subr.mxu0 0.0
        %973 = vmatpush1.msra.mxu0 0.0
        %974 = vmatprep.subr.mxu0 0.0
        %975 = vmatpush1.msra.mxu0 0.0
        %976 = vmatprep.subr.mxu0 0.0
        %977 = vmatpush1.msra.mxu0 0.0
        %978 = vmatprep.subr.mxu0 0.0
        %979 = vmatpush1.msra.mxu0 0.0
        %980 = vmatprep.subr.mxu0 0.0
        %981 = vmatpush1.msra.mxu0 0.0
        %982 = vmatprep.subr.mxu0 0.0
        %983 = vmatpush1.msra.mxu0 0.0
        %984 = vmatprep.subr.mxu0 0.0
        %985 = vmatpush1.msra.mxu0 0.0
        %986 = vmatprep.subr.mxu0 0.0
        %987 = vmatpush1.msra.mxu0 0.0
        %988 = vmatprep.subr.mxu0 0.0
        %989 = vmatpush1.msra.mxu0 0.0
        %990 = vmatprep.subr.mxu0 0.0
        %991 = vmatpush1.msra.mxu0 0.0
        %992 = vmatprep.subr.mxu0 0.0
        %993 = vmatpush1.msra.mxu0 0.0
        %994 = vmatprep.subr.mxu0 0.0
        %995 = vmatpush1.msra.mxu0 0.0
        %996 = vmatprep.subr.mxu0 0.0
        %997 = vmatpush1.msra.mxu0 0.0
        %998 = vmatprep.mubr.f32.mxu0 0.0
        %v999 = vand.u32 %v701, 4294901760
        %v1000 = vsub.f32 %v701, %v999
        %v1001 = vand.u32 %v1000, 4294901760
        %1002 = vmatmul.mubr.f32.gmra.mrb[0].mxu0 %v1001
        %v1003 = vpop.f32.mrb[0].mxu0
        %v1004 = vadd.f32 %v930, %v1003
        %v1005 = vpop.f32.mrb[0].mxu0
        %1006 = vdwg.mxu0
        %1007 = vmatprep.subr.mxu0 0.0
        %v1008 = vand.u32 %v705, 4294901760
        %v1009 = vsub.f32 %v705, %v1008
        %v1010 = vand.u32 %v1009, 4294901760
        %1011 = vmatpush1.msra.mxu0 %v1010
        %1012 = vmatprep.subr.mxu0 0.0
        %1013 = vmatpush1.msra.mxu0 0.0
        %1014 = vmatprep.subr.mxu0 0.0
        %1015 = vmatpush1.msra.mxu0 0.0
        %1016 = vmatprep.subr.mxu0 0.0
        %1017 = vmatpush1.msra.mxu0 0.0
        %1018 = vmatprep.subr.mxu0 0.0
        %1019 = vmatpush1.msra.mxu0 0.0
        %1020 = vmatprep.subr.mxu0 0.0
        %1021 = vmatpush1.msra.mxu0 0.0
        %1022 = vmatprep.subr.mxu0 0.0
        %1023 = vmatpush1.msra.mxu0 0.0
        %1024 = vmatprep.subr.mxu0 0.0
        %1025 = vmatpush1.msra.mxu0 0.0
        %1026 = vmatprep.subr.mxu0 0.0
        %1027 = vmatpush1.msra.mxu0 0.0
        %1028 = vmatprep.subr.mxu0 0.0
        %1029 = vmatpush1.msra.mxu0 0.0
        %1030 = vmatprep.subr.mxu0 0.0
        %1031 = vmatpush1.msra.mxu0 0.0
        %1032 = vmatprep.subr.mxu0 0.0
        %1033 = vmatpush1.msra.mxu0 0.0
        %1034 = vmatprep.subr.mxu0 0.0
        %1035 = vmatpush1.msra.mxu0 0.0
        %1036 = vmatprep.subr.mxu0 0.0
        %1037 = vmatpush1.msra.mxu0 0.0
        %1038 = vmatprep.subr.mxu0 0.0
        %1039 = vmatpush1.msra.mxu0 0.0
        %1040 = vmatprep.subr.mxu0 0.0
        %1041 = vmatpush1.msra.mxu0 0.0
        %1042 = vmatprep.subr.mxu0 0.0
        %1043 = vmatpush1.msra.mxu0 0.0
        %1044 = vmatprep.subr.mxu0 0.0
        %1045 = vmatpush1.msra.mxu0 0.0
        %1046 = vmatprep.subr.mxu0 0.0
        %1047 = vmatpush1.msra.mxu0 0.0
        %1048 = vmatprep.subr.mxu0 0.0
        %1049 = vmatpush1.msra.mxu0 0.0
        %1050 = vmatprep.subr.mxu0 0.0
        %1051 = vmatpush1.msra.mxu0 0.0
        %1052 = vmatprep.subr.mxu0 0.0
        %1053 = vmatpush1.msra.mxu0 0.0
        %1054 = vmatprep.subr.mxu0 0.0
        %1055 = vmatpush1.msra.mxu0 0.0
        %1056 = vmatprep.subr.mxu0 0.0
        %1057 = vmatpush1.msra.mxu0 0.0
        %1058 = vmatprep.subr.mxu0 0.0
        %1059 = vmatpush1.msra.mxu0 0.0
        %1060 = vmatprep.subr.mxu0 0.0
        %1061 = vmatpush1.msra.mxu0 0.0
        %1062 = vmatprep.subr.mxu0 0.0
        %1063 = vmatpush1.msra.mxu0 0.0
        %1064 = vmatprep.subr.mxu0 0.0
        %1065 = vmatpush1.msra.mxu0 0.0
        %1066 = vmatprep.subr.mxu0 0.0
        %1067 = vmatpush1.msra.mxu0 0.0
        %1068 = vmatprep.subr.mxu0 0.0
        %1069 = vmatpush1.msra.mxu0 0.0
        %1070 = vmatprep.subr.mxu0 0.0
        %1071 = vmatpush1.msra.mxu0 0.0
        %1072 = vmatprep.subr.mxu0 0.0
        %1073 = vmatpush1.msra.mxu0 0.0
        %1074 = vmatprep.mubr.f32.mxu0 0.0
        %v1075 = vand.u32 %v701, 4294901760
        %1076 = vmatmul.mubr.f32.gmra.mrb[0].mxu0 %v1075
        %v1077 = vpop.f32.mrb[0].mxu0
        %v1078 = vadd.f32 %v1004, %v1077
        %v1079 = vpop.f32.mrb[0].mxu0
        %1080 = vdwg.mxu0
        %1081 = vmatprep.subr.mxu0 0.0
        %v1082 = vand.u32 %v705, 4294901760
        %1083 = vmatpush1.msra.mxu0 %v1082
        %1084 = vmatprep.subr.mxu0 0.0
        %1085 = vmatpush1.msra.mxu0 0.0
        %1086 = vmatprep.subr.mxu0 0.0
        %1087 = vmatpush1.msra.mxu0 0.0
        %1088 = vmatprep.subr.mxu0 0.0
        %1089 = vmatpush1.msra.mxu0 0.0
        %1090 = vmatprep.subr.mxu0 0.0
        %1091 = vmatpush1.msra.mxu0 0.0
        %1092 = vmatprep.subr.mxu0 0.0
        %1093 = vmatpush1.msra.mxu0 0.0
        %1094 = vmatprep.subr.mxu0 0.0
        %1095 = vmatpush1.msra.mxu0 0.0
        %1096 = vmatprep.subr.mxu0 0.0
        %1097 = vmatpush1.msra.mxu0 0.0
        %1098 = vmatprep.subr.mxu0 0.0
        %1099 = vmatpush1.msra.mxu0 0.0
        %1100 = vmatprep.subr.mxu0 0.0
        %1101 = vmatpush1.msra.mxu0 0.0
        %1102 = vmatprep.subr.mxu0 0.0
        %1103 = vmatpush1.msra.mxu0 0.0
        %1104 = vmatprep.subr.mxu0 0.0
        %1105 = vmatpush1.msra.mxu0 0.0
        %1106 = vmatprep.subr.mxu0 0.0
        %1107 = vmatpush1.msra.mxu0 0.0
        %1108 = vmatprep.subr.mxu0 0.0
        %1109 = vmatpush1.msra.mxu0 0.0
        %1110 = vmatprep.subr.mxu0 0.0
        %1111 = vmatpush1.msra.mxu0 0.0
        %1112 = vmatprep.subr.mxu0 0.0
        %1113 = vmatpush1.msra.mxu0 0.0
        %1114 = vmatprep.subr.mxu0 0.0
        %1115 = vmatpush1.msra.mxu0 0.0
        %1116 = vmatprep.subr.mxu0 0.0
        %1117 = vmatpush1.msra.mxu0 0.0
        %1118 = vmatprep.subr.mxu0 0.0
        %1119 = vmatpush1.msra.mxu0 0.0
        %1120 = vmatprep.subr.mxu0 0.0
        %1121 = vmatpush1.msra.mxu0 0.0
        %1122 = vmatprep.subr.mxu0 0.0
        %1123 = vmatpush1.msra.mxu0 0.0
        %1124 = vmatprep.subr.mxu0 0.0
        %1125 = vmatpush1.msra.mxu0 0.0
        %1126 = vmatprep.subr.mxu0 0.0
        %1127 = vmatpush1.msra.mxu0 0.0
        %1128 = vmatprep.subr.mxu0 0.0
        %1129 = vmatpush1.msra.mxu0 0.0
        %1130 = vmatprep.subr.mxu0 0.0
        %1131 = vmatpush1.msra.mxu0 0.0
        %1132 = vmatprep.subr.mxu0 0.0
        %1133 = vmatpush1.msra.mxu0 0.0
        %1134 = vmatprep.subr.mxu0 0.0
        %1135 = vmatpush1.msra.mxu0 0.0
        %1136 = vmatprep.subr.mxu0 0.0
        %1137 = vmatpush1.msra.mxu0 0.0
        %1138 = vmatprep.subr.mxu0 0.0
        %1139 = vmatpush1.msra.mxu0 0.0
        %1140 = vmatprep.subr.mxu0 0.0
        %1141 = vmatpush1.msra.mxu0 0.0
        %1142 = vmatprep.subr.mxu0 0.0
        %1143 = vmatpush1.msra.mxu0 0.0
        %1144 = vmatprep.subr.mxu0 0.0
        %1145 = vmatpush1.msra.mxu0 0.0
        %1146 = vmatprep.mubr.f32.mxu0 0.0
        %v1147 = vand.u32 %v701, 4294901760
        %1148 = vmatmul.mubr.f32.gmra.mrb[0].mxu0 %v1147
        %v1149 = vpop.f32.mrb[0].mxu0
        %v1150 = vadd.f32 %v1078, %v1149
        %v1151 = vpop.f32.mrb[0].mxu0
        %1152 = vdwg.mxu0
        %v1153 = vxor.u32 %v1150, 2147483648
        %v1154 = vmul.f32 %v1153, 1.442695
        %v1155 = vpow.pop %v1154
        %v1156 = vadd.f32 %v1155, 1.0
        %v1157 = vrcp.pop %v1156
        %v1158 = vmul.f32 1.0, %v1157
        %v1159 = vlaneseq
        %v1160 = vshrl.u32 %v1159, 7
        %v1161 = vsub.s32 0, %v1160
        %v1162 = vrot.slane %v1158, %v1161
        %1164 = vbcast.lane.b32.xlu0 %v1162, 256
        %v1165 = vpop.permute.xlu0 %1164
        %s1167 = sor.u32 256, 8
        %1168 = vbcast.lane.b32.xlu0 %v1162, %s1167
        %v1169 = vpop.permute.xlu0 %1168
        %s1171 = sor.u32 256, 16
        %1172 = vbcast.lane.b32.xlu0 %v1162, %s1171
        %v1173 = vpop.permute.xlu0 %1172
        %s1175 = sor.u32 256, 24
        %1176 = vbcast.lane.b32.xlu0 %v1162, %s1175
        %v1177 = vpop.permute.xlu0 %1176
        %v1178 = vmul.f32 %v189, %v1165
        %v1179 = vmul.f32 %v190, %v1165
        %v1180 = vmul.f32 %v191, %v1169
        %v1181 = vmul.f32 %v192, %v1169
        %v1182 = vmul.f32 %v193, %v1173
        %v1183 = vmul.f32 %v194, %v1173
        %v1184 = vmul.f32 %v195, %v1177
        %v1185 = vmul.f32 %v196, %v1177
        %1186 = vst [vmem:[%s188] sm:$0xff] %v1178
        %1187 = vst [vmem:[%s188 + $0x8] sm:$0xff] %v1179
        %1188 = vst [vmem:[%s188 + $0x10] sm:$0xff] %v1180
        %1189 = vst [vmem:[%s188 + $0x18] sm:$0xff] %v1181
        %1190 = vst [vmem:[%s188 + $0x20] sm:$0xff] %v1182
        %1191 = vst [vmem:[%s188 + $0x28] sm:$0xff] %v1183
        %1192 = vst [vmem:[%s188 + $0x30] sm:$0xff] %v1184
        %1193 = vst [vmem:[%s188 + $0x38] sm:$0xff] %v1185
        %s1194 = sand.u32 %s96, 1
        %s1195 = scalar_lea.sflag [#allocation4], %s1194
        %s1196 = sand.u32 %s96, 1
        %s1197 = smul.addr %s1196, 64
        %s1198 = scalar_lea.vmem [#allocation5], %s1197
        // Predicated region
        $region37: #{tpu_custom_call.1} parent=31 // pred_check
          %p1199 = pneg %p106
        $region38: #{tpu_custom_call.1} parent=31 // pred_check_branch
          %1201 = sbr.rel (%p1199) target = $region40
        $region39: #{tpu_custom_call.1} parent=31 // pred_region
          %s1203 = ssub.s32 1024, 1024
          %1204 = vsyncadd %s1195, %s1203
          %s1205 = smul.addr %s20, 8
          %s1206 = smul.addr %s1205, 128
          %s1207 = scalar_lea.hbm %s3, %s1206
          %s1208 = sshll.u32 %s1198, 4
          %s1209 = int_to_ptr.vmem [resolvable:$true] %s1208
          %1214 = dma.vmem_to_hbm [thread:$0]  %s1209, 1024, %s1207, %s1195, 256, 256, 16
        $region40: #{tpu_custom_call.1} parent=31 // pred_fallthru
          _
      $region32: #{tpu_custom_call.1} parent=5 // pred_fallthru
        _
      %p1215 = scmp.le.s32.totalorder 2, %s15
      // Predicated region
      $region41: #{tpu_custom_call.1} parent=5 // pred_check
        %p1216 = pneg %p1215
      $region42: #{tpu_custom_call.1} parent=5 // pred_check_branch
        %1218 = sbr.rel (%p1216) target = $region44
      $region43: #{tpu_custom_call.1} parent=5 // pred_region
        %s1219 = ssub.s32 %s15, 2
        // Predicated region
        $region45: #{tpu_custom_call.1} parent=43 // pred_check
          %p1220 = pneg %p112
        $region46: #{tpu_custom_call.1} parent=43 // pred_check_branch
          %1222 = sbr.rel (%p1220) target = $region48
        $region47: #{tpu_custom_call.1} parent=43 // pred_region
          %s1223 = sand.u32 %s97, 1
          %s1224 = scalar_lea.sflag [#allocation4], %s1223
          %s1225 = sand.u32 %s97, 1
          %s1226 = smul.addr %s1225, 64
          %s1227 = scalar_lea.vmem [#allocation5], %s1226
          %1228 = dma.done %s1224, 1024
        $region48: #{tpu_custom_call.1} parent=43 // pred_fallthru
          _
      $region44: #{tpu_custom_call.1} parent=5 // pred_fallthru
        _
    $region6: #{tpu_custom_call.1} parent=1 // loop_footer
      %s19 = sadd.s32 1, %s15
    $region7: #{tpu_custom_call.1} parent=1 // loop_footer_branch
      %14 = sbr.rel target = $region3
    $region8: #{tpu_custom_call.1} parent=1 // loop_exit
      _
    %1229 = vsyncpa [#allocation3], 1
    %s1230 = scalar_lea.sflag [#allocation3], 1
    %1231 = vsyncpa %s1230, 1
    %1232 = vsyncpa [#allocation4], 1
    %s1233 = scalar_lea.sflag [#allocation4], 1
    %1234 = vsyncpa %s1233, 1

</llo_original>
